<compile_context>
chip_gen: v6e
topology: v6e:2x2x1
jax: 0.10.0
libtpu: 0.0.40
codegen_flags: <defaults>
</compile_context>

<pallas_src>
import jax
import jax.numpy as jnp
from jax.experimental import pallas as pl
from jax.experimental.pallas import tpu as pltpu

RANK = 2

# VMEM sizing (portable across v5e / v6e / v7x):
#  * v7x has only 64 MiB VMEM per TensorCore -> cap the scoped limit at 48 MiB.
#  * v5e's default scoped limit is 16 MiB -> raise it explicitly.
#  * Size the double-buffered x/y pipeline working set to ~32 MiB (~2/3 of the
#    scoped limit), leaving headroom for the resident W tile + compiler scratch.
_VMEM_LIMIT_BYTES = 48 * 1024 * 1024
_VMEM_PIPE_BUDGET = 32 * 1024 * 1024
_MAX_LANE_TILE = 32768  # absolute cap on the minor-axis tile (lanes)


def _matmul_kernel(w_ref, x_ref, o_ref):
    # w_ref: [P, L]  composed low-rank weight, resident across all grid steps.
    # x_ref: [L, t]  lane-dense input tile.
    # o_ref: [P, t]  lane-dense output tile.
    o_ref[...] = jnp.dot(
        w_ref[...], x_ref[...], preferred_element_type=jnp.float32
    ).astype(o_ref.dtype)


def _choose_lane_tile(minor, rows_in, rows_out, itemsize, outer_steps):
    """Largest lane tile whose double-buffered x+y working set fits the budget."""
    per_lane = (rows_in + rows_out) * itemsize
    t = _VMEM_PIPE_BUDGET // (2 * per_lane)
    t = min(t, _MAX_LANE_TILE)
    t = max(128, (t // 128) * 128)
    if minor > t:
        # Multiple grid steps; last block may be partial (masked stores only
        # on the tail, correct because output columns are independent).
        return t
    # Whole minor axis fits in one block.
    if outer_steps >= 2 or minor <= 256:
        return minor  # block == full dim is always layout-legal
    # Split into >= 2 (parallel) grid steps so both v7x TensorCores get work
    # and the pipeline can overlap DMA with compute.
    half = ((pl.cdiv(minor, 2) + 127) // 128) * 128
    return min(half, minor)


def _lowrank_native(x, w):
    """Native [B, L, C] layout path (no HBM transposes); y: [B, P, C]."""
    B, L, C = x.shape
    P = w.shape[0]
    itemsize = jnp.dtype(x.dtype).itemsize
    tc = _choose_lane_tile(C, L, P, itemsize, outer_steps=B)
    grid = (B, pl.cdiv(C, tc))

    cost = pl.CostEstimate(
        flops=2 * P * L * B * C,
        transcendentals=0,
        bytes_accessed=(L + P) * B * C * itemsize
        + P * L * jnp.dtype(w.dtype).itemsize,
    )

    return pl.pallas_call(
        _matmul_kernel,
        out_shape=jax.ShapeDtypeStruct((B, P, C), x.dtype),
        grid_spec=pltpu.PrefetchScalarGridSpec(
            num_scalar_prefetch=0,
            grid=grid,
            in_specs=[
                pl.BlockSpec((P, L), lambda b, j: (0, 0)),            # W (resident)
                pl.BlockSpec((None, L, tc), lambda b, j: (b, 0, j)),  # x tile
            ],
            out_specs=pl.BlockSpec((None, P, tc), lambda b, j: (b, 0, j)),
        ),
        compiler_params=pltpu.CompilerParams(
            dimension_semantics=("parallel", "parallel"),
            vmem_limit_bytes=_VMEM_LIMIT_BYTES,
        ),
        cost_estimate=cost,
    )(w, x)


def _lowrank_flat(x, w):
    """Small-C path: flatten batch*channel into one lane-dense axis."""
    B, L, C = x.shape
    P = w.shape[0]
    N = B * C
    itemsize = jnp.dtype(x.dtype).itemsize

    # Layout plumbing: present a lane-dense [L, B*C] slab to the kernel.
    x2 = jnp.transpose(x, (1, 0, 2)).reshape(L, N)

    tn = _choose_lane_tile(N, L, P, itemsize, outer_steps=1)
    grid = (pl.cdiv(N, tn),)

    cost = pl.CostEstimate(
        flops=2 * P * L * N,
        transcendentals=0,
        bytes_accessed=(L + P) * N * itemsize
        + P * L * jnp.dtype(w.dtype).itemsize,
    )

    y2 = pl.pallas_call(
        _matmul_kernel,
        out_shape=jax.ShapeDtypeStruct((P, N), x.dtype),
        grid_spec=pltpu.PrefetchScalarGridSpec(
            num_scalar_prefetch=0,
            grid=grid,
            in_specs=[
                pl.BlockSpec((P, L), lambda j: (0, 0)),    # W (resident)
                pl.BlockSpec((L, tn), lambda j: (0, j)),   # x tile, lane-dense
            ],
            out_specs=pl.BlockSpec((P, tn), lambda j: (0, j)),
        ),
        compiler_params=pltpu.CompilerParams(
            dimension_semantics=("parallel",),
            vmem_limit_bytes=_VMEM_LIMIT_BYTES,
        ),
        cost_estimate=cost,
    )(w, x2)

    # Undo the layout plumbing: [P, B*C] -> [B, P, C]
    return jnp.transpose(y2.reshape(P, B, C), (1, 0, 2))


def lowrank_linear(x, aw, bw):
    """x: [B, seq_len, C], aw: [pred_len, rank], bw: [rank, seq_len] -> [B, pred_len, C]."""
    B, L, C = x.shape
    P, R = aw.shape
    assert bw.shape == (R, L)

    # Compose the tiny low-rank weight once outside the kernel; [P, L] stays
    # resident in VMEM inside the kernel (double-buffered but constant-indexed).
    w = jnp.dot(aw, bw, preferred_element_type=jnp.float32).astype(x.dtype)

    if C >= 128:
        return _lowrank_native(x, w)
    return _lowrank_flat(x, w)


if __name__ == "__main__":
    # Small shapes consistent with the module's forward.
    batch, seq_len, pred_len, channels = 2, 16, 8, 4

    # Deterministic parameter init, exactly as in the module's __init__.
    aw = (1.0 / seq_len) * jnp.ones((pred_len, RANK), dtype=jnp.float32)
    bw = jnp.ones((RANK, seq_len), dtype=jnp.float32)

    key = jax.random.PRNGKey(0)
    x = jax.random.normal(key, (batch, seq_len, channels), dtype=jnp.float32)

    y = jax.block_until_ready(lowrank_linear(x, aw, bw))
    y_ref = jnp.einsum("pl,blc->bpc", aw @ bw, x)
    assert y.shape == (batch, pred_len, channels)
    assert jnp.allclose(y, y_ref, atol=1e-5, rtol=1e-5)

    # Native-layout (C >= 128) path, no wrapper transposes, multi-step grid.
    B2, L2, P2, C2 = 4, 32, 16, 384
    k1, k2, k3 = jax.random.split(key, 3)
    aw2 = jax.random.normal(k1, (P2, RANK), dtype=jnp.float32)
    bw2 = jax.random.normal(k2, (RANK, L2), dtype=jnp.float32)
    x2 = jax.random.normal(k3, (B2, L2, C2), dtype=jnp.float32)
    y2 = jax.block_until_ready(lowrank_linear(x2, aw2, bw2))
    y2_ref = jnp.einsum("pl,blc->bpc", aw2 @ bw2, x2)
    assert jnp.allclose(y2, y2_ref, atol=1e-4, rtol=1e-4)

    # Flattened small-C path with a split (2-step) lane grid and a partial tail tile.
    B3, L3, P3, C3 = 64, 24, 12, 6  # N = 384 -> tiles of 256 + 128
    k4, k5, k6 = jax.random.split(k3, 3)
    aw3 = jax.random.normal(k4, (P3, RANK), dtype=jnp.float32)
    bw3 = jax.random.normal(k5, (RANK, L3), dtype=jnp.float32)
    x3 = jax.random.normal(k6, (B3, L3, C3), dtype=jnp.float32)
    y3 = jax.block_until_ready(lowrank_linear(x3, aw3, bw3))
    y3_ref = jnp.einsum("pl,blc->bpc", aw3 @ bw3, x3)
    assert jnp.allclose(y3, y3_ref, atol=1e-4, rtol=1e-4)

    print("KERNEL_OK")
</pallas_src>

<mosaic_0001>
module attributes {stable_mosaic.version = 11 : i64} {
  func.func @_matmul_kernel(%arg0: i32, %arg1: memref<8x16xf32, #tpu.memory_space<vmem>>, %arg2: memref<16x8xf32, #tpu.memory_space<vmem>>, %arg3: memref<8x8xf32, #tpu.memory_space<vmem>>) attributes {dimension_semantics = [#tpu.dimension_semantics<parallel>], iteration_bounds = array<i64: 1>, scalar_prefetch = 0 : i64, scratch_operands = 0 : i64, tpu.core_type = #tpu.core_type<tc>, window_params = [{pipeline_mode = #tpu.pipeline_mode<synchronous>, transform_indices = @transform_0, window_bounds = array<i64: 8, 16>}, {transform_indices = @transform_1, window_bounds = array<i64: 16, 8>}, {transform_indices = @transform_2, window_bounds = array<i64: 8, 8>}]} {
    %c0 = arith.constant 0 : index
    %c0_0 = arith.constant 0 : index
    %0 = vector.load %arg1[%c0, %c0_0] : memref<8x16xf32, #tpu.memory_space<vmem>>, vector<8x16xf32>
    %c0_1 = arith.constant 0 : index
    %c0_2 = arith.constant 0 : index
    %1 = vector.load %arg2[%c0_1, %c0_2] : memref<16x8xf32, #tpu.memory_space<vmem>>, vector<16x8xf32>
    %cst = arith.constant dense<0.000000e+00> : vector<8x8xf32>
    %2 = tpu.matmul %0, %1, %cst {dimension_numbers = #tpu.dot_dimension_numbers<[1], [0], [0], [1], [0, 0, 1, 1], [], []>} : vector<8x16xf32>, vector<16x8xf32>, vector<8x8xf32> -> vector<8x8xf32>
    %c0_3 = arith.constant 0 : index
    %c0_4 = arith.constant 0 : index
    %3 = vector.load %arg3[%c0_3, %c0_4] : memref<8x8xf32, #tpu.memory_space<vmem>>, vector<8x8xf32>
    tpu.vector_store %arg3[%c0_3, %c0_4], %2 {strides = array<i32>} : memref<8x8xf32, #tpu.memory_space<vmem>>, vector<8x8xf32>,
    return
  }
  func.func @transform_0(%arg0: i32) -> (i32, i32) {
    %c0_i32 = arith.constant 0 : i32
    %c0_i32_0 = arith.constant 0 : i32
    %c0_i32_1 = arith.constant 0 : i32
    return %c0_i32, %c0_i32_0 : i32, i32
  }
  func.func @transform_1(%arg0: i32) -> (i32, i32) {
    %c0_i32 = arith.constant 0 : i32
    %c0_i32_0 = arith.constant 0 : i32
    return %c0_i32, %arg0 : i32, i32
  }
  func.func @transform_2(%arg0: i32) -> (i32, i32) {
    %c0_i32 = arith.constant 0 : i32
    %c0_i32_0 = arith.constant 0 : i32
    return %c0_i32, %arg0 : i32, i32
  }
}

</mosaic_0001>

<llo_original>
// kernel: tpu_custom_call.1
$region0: #{tpu_custom_call.1}
  #allocation0 [shape = 'u32[]', space=smem, size = 0x4, offset = 0x4, fixed_abs, tag = 'smem constant byte address 0x4 - core index']
  #allocation1 [shape = 'u32[144,128]{1,0:T(1,128)}', space=vmem, size = 0x12000, scoped, tag = 'internal scratch']
  %s0 = inlined_call_operand.vmem [shape: f32[8,16], index: 0, kind: input, shape index: {}]
  %s1 = inlined_call_operand.vmem [shape: f32[16,8], index: 1, kind: input, shape index: {}]
  %s2 = inlined_call_operand.hbm [shape: f32[8,8], index: 2, kind: output, shape index: {}]
  %s3 = sld [smem:[#allocation0]]
  $region18: #{tpu_custom_call.1} parent=0
    _
  %s5 = ssub.s32 1, %s3
  %s6 = scalar_select 0, %s5, %s3
  $region1: #{tpu_custom_call.1} parent=0
    #allocation2 [shape = 'u8[4096]{0}', space=vmem, size = 0x1000, scoped, tag = 'output window, operand 0, single buffered']
    #allocation3 [shape = 's32[1]{0}', space=sflag, size = 0x4, scoped, tag = 'scoped memory for tpu_custom_call.1']
    %7 = vsyncpa [#allocation3], 0
    // Predicated region
    $region2: #{tpu_custom_call.1} parent=1 // pred_check
      _
    $region3: #{tpu_custom_call.1} parent=1 // pred_check_branch
      %9 = sbr.rel (0) target = $region5
    $region4: #{tpu_custom_call.1} parent=1 // pred_region
      _
    $region5: #{tpu_custom_call.1} parent=1 // pred_fallthru
      _
    // Predicated region
    $region6: #{tpu_custom_call.1} parent=1 // pred_check
      _
    $region7: #{tpu_custom_call.1} parent=1 // pred_check_branch
      %11 = sbr.rel (0) target = $region9
    $region8: #{tpu_custom_call.1} parent=1 // pred_region
      _
    $region9: #{tpu_custom_call.1} parent=1 // pred_fallthru
      _
    %v12 = vld [vmem:[%s0] sm:$0xff]
    %v13 = vld [vmem:[%s1] sm:$0xff]
    %v14 = vld [vmem:[%s1 + $0x8] sm:$0xff]
    %vm15 = vcmask 130048
    %v17 = vsel %vm15, %v12, 0
    %19 = vmatprep.subr.mxu0 0.0
    %20 = vmatpush1.msra.mxu0 0.0
    %21 = vmatprep.subr.mxu0 0.0
    %22 = vmatpush1.msra.mxu0 0.0
    %23 = vmatprep.subr.mxu0 0.0
    %24 = vmatpush1.msra.mxu0 0.0
    %25 = vmatprep.subr.mxu0 0.0
    %26 = vmatpush1.msra.mxu0 0.0
    %27 = vmatprep.subr.mxu0 0.0
    %28 = vmatpush1.msra.mxu0 0.0
    %29 = vmatprep.subr.mxu0 0.0
    %30 = vmatpush1.msra.mxu0 0.0
    %31 = vmatprep.subr.mxu0 0.0
    %32 = vmatpush1.msra.mxu0 0.0
    %33 = vmatprep.subr.mxu0 0.0
    %34 = vmatpush1.msra.mxu0 0.0
    %35 = vmatprep.subr.mxu0 0.0
    %36 = vmatpush1.msra.mxu0 0.0
    %37 = vmatprep.subr.mxu0 0.0
    %38 = vmatpush1.msra.mxu0 0.0
    %39 = vmatprep.subr.mxu0 0.0
    %40 = vmatpush1.msra.mxu0 0.0
    %41 = vmatprep.subr.mxu0 0.0
    %42 = vmatpush1.msra.mxu0 0.0
    %43 = vmatprep.subr.mxu0 0.0
    %44 = vmatpush1.msra.mxu0 0.0
    %45 = vmatprep.subr.mxu0 0.0
    %46 = vmatpush1.msra.mxu0 0.0
    %47 = vmatprep.subr.mxu0 0.0
    %48 = vmatpush1.msra.mxu0 %v14
    %49 = vmatprep.subr.mxu0 0.0
    %50 = vmatpush1.msra.mxu0 %v13
    %51 = vmatprep.subr.mxu0 0.0
    %52 = vmatpush2.msra.mxu0 0.0
    %53 = vmatprep.subr.mxu0 0.0
    %54 = vmatpush2.msra.mxu0 0.0
    %55 = vmatprep.subr.mxu0 0.0
    %56 = vmatpush2.msra.mxu0 0.0
    %57 = vmatprep.subr.mxu0 0.0
    %58 = vmatpush2.msra.mxu0 0.0
    %59 = vmatprep.subr.mxu0 0.0
    %60 = vmatpush2.msra.mxu0 0.0
    %61 = vmatprep.subr.mxu0 0.0
    %62 = vmatpush2.msra.mxu0 0.0
    %63 = vmatprep.subr.mxu0 0.0
    %64 = vmatpush2.msra.mxu0 0.0
    %65 = vmatprep.subr.mxu0 0.0
    %66 = vmatpush2.msra.mxu0 0.0
    %67 = vmatprep.subr.mxu0 0.0
    %68 = vmatpush2.msra.mxu0 0.0
    %69 = vmatprep.subr.mxu0 0.0
    %70 = vmatpush2.msra.mxu0 0.0
    %71 = vmatprep.subr.mxu0 0.0
    %72 = vmatpush2.msra.mxu0 0.0
    %73 = vmatprep.subr.mxu0 0.0
    %74 = vmatpush2.msra.mxu0 0.0
    %75 = vmatprep.subr.mxu0 0.0
    %76 = vmatpush2.msra.mxu0 0.0
    %77 = vmatprep.subr.mxu0 0.0
    %78 = vmatpush2.msra.mxu0 0.0
    %79 = vmatprep.subr.mxu0 0.0
    %80 = vmatpush2.msra.mxu0 0.0
    %81 = vmatprep.subr.mxu0 0.0
    %82 = vmatpush2.msra.mxu0 0.0
    %83 = vmatprep.mubr.f32.mxu0 0.0
    %84 = vmatmul.mubr.f32.gmra.mxu0 %v17
    %v85 = vpop.f32.mrf.mxu0
    %v86 = vadd.f32 0.0, %v85
    %v87 = vpop.f32.mrf.mxu0
    %88 = vdwg.mxu0
    %vm89 = vcmask 64512
    %90 = vst.msk [vmem:[#allocation2] sm:$0xff] %vm89, %v86
    // Predicated region
    $region10: #{tpu_custom_call.1} parent=1 // pred_check
      _
    $region11: #{tpu_custom_call.1} parent=1 // pred_check_branch
      %92 = sbr.rel (0) target = $region13
    $region12: #{tpu_custom_call.1} parent=1 // pred_region
      %s94 = ssub.s32 128, 128
      %95 = vsyncadd [#allocation3], %s94
      %s97 = sshll.u32 [#allocation2], 4
      %s98 = int_to_ptr.vmem [resolvable:$true] %s97
      %100 = dma.vmem_to_hbm [thread:$0]  %s98, 128, %s2, [#allocation3]
    $region13: #{tpu_custom_call.1} parent=1 // pred_fallthru
      _
    // Predicated region
    $region14: #{tpu_custom_call.1} parent=1 // pred_check
      _
    $region15: #{tpu_custom_call.1} parent=1 // pred_check_branch
      %102 = sbr.rel (0) target = $region17
    $region16: #{tpu_custom_call.1} parent=1 // pred_region
      %103 = dma.done [#allocation3], 128
    $region17: #{tpu_custom_call.1} parent=1 // pred_fallthru
      _
    %104 = vsyncpa [#allocation3], 1

</llo_original>
